<compile_context>
chip_gen: v7x
topology: tpu7x:2x2x1
jax: 0.10.0
libtpu: 0.0.40
codegen_flags: <defaults>
</compile_context>

<pallas_src>
import functools

import jax
import jax.numpy as jnp
from jax import lax
from jax.experimental import pallas as pl
from jax.experimental.pallas import tpu as pltpu

# MXU operand dtype. f32 for the tight small-shape check; use jnp.bfloat16 at production
# DenseNet channel counts (accumulation stays f32 via preferred_element_type).
_MM_DTYPE = jnp.float32

# Explicit scoped-VMEM limit: above the 32 MiB default on v6e/v7x, well below v7x's
# 64 MiB physical per TensorCore.  Tile sizing below targets a fraction of this.
_VMEM_LIMIT_BYTES = 40 * 1024 * 1024
_TILE_BUDGET_BYTES = 12 * 1024 * 1024


def _stats_kernel(x_ref, g1_ref, b1_ref, w1_ref, g2_ref, b2_ref,
                  scale1_ref, shift1_ref, scale2_ref, shift2_ref,
                  s1_ref, q1_ref, s2_ref, q2_ref, *, inv_npix, eps):
    """grid=(2, T). Pass 0: bn1 batch stats of x. Pass 1: bn2 batch stats of h1.

    Outputs (tiny, resident accumulator blocks, written once at each pass finalize):
      scale1/shift1: folded bn1 affine, (C, 1)
      scale2/shift2: folded bn2 affine, (Cinter, 1)
    """
    p = pl.program_id(0)
    t = pl.program_id(1)
    nt = pl.num_programs(1)

    @pl.when((p == 0) & (t == 0))
    def _init():
        s1_ref[...] = jnp.zeros_like(s1_ref)
        q1_ref[...] = jnp.zeros_like(q1_ref)
        s2_ref[...] = jnp.zeros_like(s2_ref)
        q2_ref[...] = jnp.zeros_like(q2_ref)

    x = x_ref[...]                                                     # (C, tile) f32

    # ---- pass 0: single-sweep sum / sum-of-squares of x (biased var, as PyTorch) ------
    @pl.when(p == 0)
    def _acc1():
        s1_ref[...] += jnp.sum(x, axis=1, keepdims=True)
        q1_ref[...] += jnp.sum(x * x, axis=1, keepdims=True)

    @pl.when((p == 0) & (t == nt - 1))
    def _fin1():
        mean = s1_ref[...] * inv_npix
        var = q1_ref[...] * inv_npix - mean * mean
        sc = g1_ref[...] * lax.rsqrt(var + eps)
        scale1_ref[...] = sc
        shift1_ref[...] = b1_ref[...] - mean * sc

    # ---- pass 1: recompute a1/h1 per tile, accumulate h1 stats -------------------------
    @pl.when(p == 1)
    def _acc2():
        a1 = jnp.maximum(x * scale1_ref[...] + shift1_ref[...], 0.0)   # (C, tile)
        h1 = jnp.dot(w1_ref[...].astype(_MM_DTYPE), a1.astype(_MM_DTYPE),
                     preferred_element_type=jnp.float32)               # (Cinter, tile)
        s2_ref[...] += jnp.sum(h1, axis=1, keepdims=True)
        q2_ref[...] += jnp.sum(h1 * h1, axis=1, keepdims=True)

    @pl.when((p == 1) & (t == nt - 1))
    def _fin2():
        mean = s2_ref[...] * inv_npix
        var = q2_ref[...] * inv_npix - mean * mean
        sc = g2_ref[...] * lax.rsqrt(var + eps)
        scale2_ref[...] = sc
        shift2_ref[...] = b2_ref[...] - mean * sc


def _compute_kernel(x_ref, sc1_ref, sh1_ref, w1_ref, sc2_ref, sh2_ref, w2_ref, out_ref,
                    *, H, W, growth):
    """grid=(T,), tile axis 'parallel'. Per tile: bn1+relu, conv1, bn2+relu, conv3x3,
    concat.  The 3x3 conv is 9 accumulated per-tap MXU matmuls (no im2col slab)."""
    C, tile = x_ref.shape
    x = x_ref[...]                                                     # (C, tile) f32

    a1 = jnp.maximum(x * sc1_ref[...] + sh1_ref[...], 0.0)
    h1 = jnp.dot(w1_ref[...].astype(_MM_DTYPE), a1.astype(_MM_DTYPE),
                 preferred_element_type=jnp.float32)                   # (Cinter, tile)
    a2 = jnp.maximum(h1 * sc2_ref[...] + sh2_ref[...], 0.0).astype(_MM_DTYPE)

    # Flat pixel index within tile: tile is a whole number of images (multiple of H*W),
    # so position-in-image = lane % (H*W); taps that cross a row/image edge are zeroed
    # (zero padding), matching 3x3 'same' conv semantics. Rolls wrap only at tile ends,
    # which are image boundaries and therefore masked.
    lane = lax.broadcasted_iota(jnp.int32, (1, tile), 1)
    wpos = lane % W
    hpos = (lane // W) % H

    acc = jnp.zeros((growth, tile), jnp.float32)
    for k in range(9):                                                 # static unroll
        dy, dx = k // 3 - 1, k % 3 - 1
        off = dy * W + dx
        tap = a2 if off == 0 else pltpu.roll(a2, (-off) % tile, axis=1)
        if not (dy == 0 and dx == 0):
            ok = ((hpos + dy >= 0) & (hpos + dy < H) &
                  (wpos + dx >= 0) & (wpos + dx < W))
            tap = jnp.where(ok, tap, 0.0)
        acc = acc + jnp.dot(w2_ref[k].astype(_MM_DTYPE), tap,
                            preferred_element_type=jnp.float32)        # (growth, tile)

    # concat([x, out], channel axis) as two slice stores. (At real DenseNet sizes C is a
    # multiple of 8, so both stores are sublane-aligned; see TODO on slab aliasing.)
    out_ref[:C, :] = x.astype(out_ref.dtype)
    out_ref[C:, :] = acc.astype(out_ref.dtype)


def _pick_images_per_tile(N, H, W, C, Cinter, growth):
    """Largest divisor of N whose tile fits the VMEM budget and is lane-legal."""
    # Rough per-pixel bytes: double-buffered x and out blocks + f32 temporaries
    # (a1, h1, a2, one tap, conv accumulator).
    per_pixel = 4 * (2 * (C + (C + growth)) + 3 * Cinter + Cinter + growth)
    ipt = max(1, min(N, _TILE_BUDGET_BYTES // max(1, per_pixel * H * W)))
    while N % ipt:
        ipt -= 1
    # Lane-dim legality: block last dim must be a multiple of 128 unless it is the full
    # axis. Fall back to a single block if not.
    if (ipt * H * W) % 128 != 0 and ipt != N:
        ipt = N
    return ipt


def bottleneck_forward_flat(x_flat, conv1_w, conv2_w, gamma1, beta1, gamma2, beta2,
                            *, N, H, W, eps=1e-5, images_per_tile=None):
    """Bottleneck forward in the persistent channels-first flat layout.

    x_flat: (C, N*H*W) f32  ->  (C + growth, N*H*W) f32
    """
    C, NP = x_flat.shape
    assert NP == N * H * W
    Cinter = conv1_w.shape[0]
    growth = conv2_w.shape[0]

    if images_per_tile is None:
        images_per_tile = _pick_images_per_tile(N, H, W, C, Cinter, growth)
    assert N % images_per_tile == 0
    tile = images_per_tile * H * W
    num_tiles = NP // tile

    x_flat = x_flat.astype(jnp.float32)
    w1k = conv1_w.reshape(Cinter, C).astype(jnp.float32)
    # (O, I, ky, kx) -> (ky, kx, O, I) -> (9, growth, Cinter): tap k = ky*3 + kx matches
    # the in-kernel tap ordering.
    w2k = jnp.transpose(conv2_w, (2, 3, 0, 1)).reshape(9, growth, Cinter).astype(jnp.float32)
    g1 = gamma1.reshape(C, 1).astype(jnp.float32)
    b1 = beta1.reshape(C, 1).astype(jnp.float32)
    g2 = gamma2.reshape(Cinter, 1).astype(jnp.float32)
    b2 = beta2.reshape(Cinter, 1).astype(jnp.float32)

    # ---- call 1: training-mode BN batch statistics (both layers) -----------------------
    stats_kernel = functools.partial(_stats_kernel, inv_npix=1.0 / NP, eps=eps)
    scale1, shift1, scale2, shift2 = pl.pallas_call(
        stats_kernel,
        out_shape=(jax.ShapeDtypeStruct((C, 1), jnp.float32),
                   jax.ShapeDtypeStruct((C, 1), jnp.float32),
                   jax.ShapeDtypeStruct((Cinter, 1), jnp.float32),
                   jax.ShapeDtypeStruct((Cinter, 1), jnp.float32)),
        grid_spec=pltpu.PrefetchScalarGridSpec(
            num_scalar_prefetch=0,
            grid=(2, num_tiles),
            in_specs=[
                pl.BlockSpec((C, tile), lambda p, t: (0, t)),
                pl.BlockSpec((C, 1), lambda p, t: (0, 0)),
                pl.BlockSpec((C, 1), lambda p, t: (0, 0)),
                pl.BlockSpec((Cinter, C), lambda p, t: (0, 0)),
                pl.BlockSpec((Cinter, 1), lambda p, t: (0, 0)),
                pl.BlockSpec((Cinter, 1), lambda p, t: (0, 0)),
            ],
            out_specs=(
                pl.BlockSpec((C, 1), lambda p, t: (0, 0)),
                pl.BlockSpec((C, 1), lambda p, t: (0, 0)),
                pl.BlockSpec((Cinter, 1), lambda p, t: (0, 0)),
                pl.BlockSpec((Cinter, 1), lambda p, t: (0, 0)),
            ),
            scratch_shapes=[pltpu.VMEM((C, 1), jnp.float32),
                            pltpu.VMEM((C, 1), jnp.float32),
                            pltpu.VMEM((Cinter, 1), jnp.float32),
                            pltpu.VMEM((Cinter, 1), jnp.float32)]),
        compiler_params=pltpu.CompilerParams(
            dimension_semantics=("arbitrary", "arbitrary"),
            vmem_limit_bytes=_VMEM_LIMIT_BYTES),
    )(x_flat, g1, b1, w1k, g2, b2)

    # ---- call 2: normalize + conv1 + conv3x3 + concat, megacore-parallel over tiles ----
    compute_kernel = functools.partial(_compute_kernel, H=H, W=W, growth=growth)
    out_flat = pl.pallas_call(
        compute_kernel,
        out_shape=jax.ShapeDtypeStruct((C + growth, NP), jnp.float32),
        grid_spec=pltpu.PrefetchScalarGridSpec(
            num_scalar_prefetch=0,
            grid=(num_tiles,),
            in_specs=[
                pl.BlockSpec((C, tile), lambda t: (0, t)),
                pl.BlockSpec((C, 1), lambda t: (0, 0)),
                pl.BlockSpec((C, 1), lambda t: (0, 0)),
                pl.BlockSpec((Cinter, C), lambda t: (0, 0)),
                pl.BlockSpec((Cinter, 1), lambda t: (0, 0)),
                pl.BlockSpec((Cinter, 1), lambda t: (0, 0)),
                pl.BlockSpec((9, growth, Cinter), lambda t: (0, 0, 0)),
            ],
            out_specs=pl.BlockSpec((C + growth, tile), lambda t: (0, t))),
        compiler_params=pltpu.CompilerParams(
            dimension_semantics=("parallel",),
            vmem_limit_bytes=_VMEM_LIMIT_BYTES),
    )(x_flat, scale1, shift1, w1k, scale2, shift2, w2k)

    return out_flat


def bottleneck_forward(x_nchw, conv1_w, conv2_w, gamma1, beta1, gamma2, beta2,
                       eps=1e-5, images_per_tile=None):
    """NCHW convenience wrapper. In a full DenseNet keep the (C, N*H*W) layout across
    the whole block and call bottleneck_forward_flat directly."""
    N, C, H, W = x_nchw.shape
    growth = conv2_w.shape[0]
    xk = jnp.transpose(x_nchw, (1, 0, 2, 3)).reshape(C, N * H * W).astype(jnp.float32)
    out_flat = bottleneck_forward_flat(
        xk, conv1_w, conv2_w, gamma1, beta1, gamma2, beta2,
        N=N, H=H, W=W, eps=eps, images_per_tile=images_per_tile)
    return jnp.transpose(out_flat.reshape(C + growth, N, H, W), (1, 0, 2, 3))


def _reference(x, w1, w2, g1, b1, g2, b2, eps=1e-5):
    """Pure-JAX reference mirroring the PyTorch forward (training-mode BatchNorm)."""
    def bn_relu(v, g, b):
        m = jnp.mean(v, axis=(0, 2, 3), keepdims=True)
        va = jnp.mean(jnp.square(v - m), axis=(0, 2, 3), keepdims=True)   # biased
        vn = (v - m) * lax.rsqrt(va + eps)
        return jnp.maximum(vn * g.reshape(1, -1, 1, 1) + b.reshape(1, -1, 1, 1), 0.0)

    h = lax.conv_general_dilated(bn_relu(x, g1, b1), w1, (1, 1), "SAME",
                                 dimension_numbers=("NCHW", "OIHW", "NCHW"))
    out = lax.conv_general_dilated(bn_relu(h, g2, b2), w2, (1, 1), "SAME",
                                   dimension_numbers=("NCHW", "OIHW", "NCHW"))
    return jnp.concatenate([x, out], axis=1)


if __name__ == "__main__":
    # Small shapes consistent with the module: nChannels=4, growthRate=8 -> inter=32.
    N, C, H, W = 2, 4, 16, 16
    growth = 8
    inter = 4 * growth

    key = jax.random.PRNGKey(0)
    kx, k1, k2, kg1, kb1, kg2, kb2 = jax.random.split(key, 7)

    x = jax.random.normal(kx, (N, C, H, W), dtype=jnp.float32)
    conv1_w = 0.2 * jax.random.normal(k1, (inter, C, 1, 1), dtype=jnp.float32)
    conv2_w = 0.1 * jax.random.normal(k2, (growth, inter, 3, 3), dtype=jnp.float32)
    gamma1 = 1.0 + 0.1 * jax.random.normal(kg1, (C,), dtype=jnp.float32)      # bn1.weight
    beta1 = 0.1 * jax.random.normal(kb1, (C,), dtype=jnp.float32)             # bn1.bias
    gamma2 = 1.0 + 0.1 * jax.random.normal(kg2, (inter,), dtype=jnp.float32)  # bn2.weight
    beta2 = 0.1 * jax.random.normal(kb2, (inter,), dtype=jnp.float32)         # bn2.bias

    # images_per_tile=1 -> 2-tile grid: exercises the tiled BN-stat accumulation and the
    # parallel compute grid (auto tiling would pick a single tile at this toy size).
    out = jax.block_until_ready(
        bottleneck_forward(x, conv1_w, conv2_w, gamma1, beta1, gamma2, beta2,
                           images_per_tile=1))

    ref = _reference(x, conv1_w, conv2_w, gamma1, beta1, gamma2, beta2)
    assert out.shape == (N, C + growth, H, W)
    assert jnp.allclose(out, ref, atol=1e-3, rtol=1e-3), float(jnp.max(jnp.abs(out - ref)))

    print("KERNEL_OK")
</pallas_src>

<mosaic_0001>
module attributes {stable_mosaic.version = 11 : i64} {
  func.func @_stats_kernel(%arg0: i32, %arg1: i32, %arg2: memref<4x256xf32, #tpu.memory_space<vmem>>, %arg3: memref<4x1xf32, #tpu.memory_space<vmem>>, %arg4: memref<4x1xf32, #tpu.memory_space<vmem>>, %arg5: memref<32x4xf32, #tpu.memory_space<vmem>>, %arg6: memref<32x1xf32, #tpu.memory_space<vmem>>, %arg7: memref<32x1xf32, #tpu.memory_space<vmem>>, %arg8: memref<4x1xf32, #tpu.memory_space<vmem>>, %arg9: memref<4x1xf32, #tpu.memory_space<vmem>>, %arg10: memref<32x1xf32, #tpu.memory_space<vmem>>, %arg11: memref<32x1xf32, #tpu.memory_space<vmem>>, %arg12: memref<4x1xf32, #tpu.memory_space<vmem>>, %arg13: memref<4x1xf32, #tpu.memory_space<vmem>>, %arg14: memref<32x1xf32, #tpu.memory_space<vmem>>, %arg15: memref<32x1xf32, #tpu.memory_space<vmem>>) attributes {dimension_semantics = [#tpu.dimension_semantics<arbitrary>, #tpu.dimension_semantics<arbitrary>], iteration_bounds = array<i64: 2, 2>, scalar_prefetch = 0 : i64, scratch_operands = 4 : i64, tpu.core_type = #tpu.core_type<tc>, window_params = [{transform_indices = @transform_0, window_bounds = array<i64: 4, 256>}, {pipeline_mode = #tpu.pipeline_mode<synchronous>, transform_indices = @transform_1, window_bounds = array<i64: 4, 1>}, {pipeline_mode = #tpu.pipeline_mode<synchronous>, transform_indices = @transform_2, window_bounds = array<i64: 4, 1>}, {pipeline_mode = #tpu.pipeline_mode<synchronous>, transform_indices = @transform_3, window_bounds = array<i64: 32, 4>}, {pipeline_mode = #tpu.pipeline_mode<synchronous>, transform_indices = @transform_4, window_bounds = array<i64: 32, 1>}, {pipeline_mode = #tpu.pipeline_mode<synchronous>, transform_indices = @transform_5, window_bounds = array<i64: 32, 1>}, {pipeline_mode = #tpu.pipeline_mode<synchronous>, transform_indices = @transform_6, window_bounds = array<i64: 4, 1>}, {pipeline_mode = #tpu.pipeline_mode<synchronous>, transform_indices = @transform_7, window_bounds = array<i64: 4, 1>}, {pipeline_mode = #tpu.pipeline_mode<synchronous>, transform_indices = @transform_8, window_bounds = array<i64: 32, 1>}, {pipeline_mode = #tpu.pipeline_mode<synchronous>, transform_indices = @transform_9, window_bounds = array<i64: 32, 1>}]} {
    %c0_i32 = arith.constant 0 : i32
    %0 = arith.cmpi eq, %arg0, %c0_i32 : i32
    %c0_i32_0 = arith.constant 0 : i32
    %1 = arith.cmpi eq, %arg1, %c0_i32_0 : i32
    %2 = arith.andi %0, %1 : i1
    %3 = arith.extui %2 : i1 to i32
    %c0_i32_1 = arith.constant 0 : i32
    %4 = arith.cmpi ne, %3, %c0_i32_1 : i32
    scf.if %4 {
      %cst = arith.constant 0.000000e+00 : f32
      %22 = vector.broadcast %cst : f32 to vector<4x1xf32>
      %c0_12 = arith.constant 0 : index
      %c0_13 = arith.constant 0 : index
      %23 = vector.load %arg12[%c0_12, %c0_13] : memref<4x1xf32, #tpu.memory_space<vmem>>, vector<4x1xf32>
      tpu.vector_store %arg12[%c0_12, %c0_13], %22 {strides = array<i32>} : memref<4x1xf32, #tpu.memory_space<vmem>>, vector<4x1xf32>,
      %cst_14 = arith.constant 0.000000e+00 : f32
      %24 = vector.broadcast %cst_14 : f32 to vector<4x1xf32>
      %c0_15 = arith.constant 0 : index
      %c0_16 = arith.constant 0 : index
      %25 = vector.load %arg13[%c0_15, %c0_16] : memref<4x1xf32, #tpu.memory_space<vmem>>, vector<4x1xf32>
      tpu.vector_store %arg13[%c0_15, %c0_16], %24 {strides = array<i32>} : memref<4x1xf32, #tpu.memory_space<vmem>>, vector<4x1xf32>,
      %cst_17 = arith.constant 0.000000e+00 : f32
      %26 = vector.broadcast %cst_17 : f32 to vector<32x1xf32>
      %c0_18 = arith.constant 0 : index
      %c0_19 = arith.constant 0 : index
      %27 = vector.load %arg14[%c0_18, %c0_19] : memref<32x1xf32, #tpu.memory_space<vmem>>, vector<32x1xf32>
      tpu.vector_store %arg14[%c0_18, %c0_19], %26 {strides = array<i32>} : memref<32x1xf32, #tpu.memory_space<vmem>>, vector<32x1xf32>,
      %cst_20 = arith.constant 0.000000e+00 : f32
      %28 = vector.broadcast %cst_20 : f32 to vector<32x1xf32>
      %c0_21 = arith.constant 0 : index
      %c0_22 = arith.constant 0 : index
      %29 = vector.load %arg15[%c0_21, %c0_22] : memref<32x1xf32, #tpu.memory_space<vmem>>, vector<32x1xf32>
      tpu.vector_store %arg15[%c0_21, %c0_22], %28 {strides = array<i32>} : memref<32x1xf32, #tpu.memory_space<vmem>>, vector<32x1xf32>,
    } else {
    }
    %c0 = arith.constant 0 : index
    %c0_2 = arith.constant 0 : index
    %5 = vector.load %arg2[%c0, %c0_2] : memref<4x256xf32, #tpu.memory_space<vmem>>, vector<4x256xf32>
    %c0_i32_3 = arith.constant 0 : i32
    %6 = arith.cmpi eq, %arg0, %c0_i32_3 : i32
    %7 = arith.extui %6 : i1 to i32
    %c0_i32_4 = arith.constant 0 : i32
    %8 = arith.cmpi ne, %7, %c0_i32_4 : i32
    scf.if %8 {
      %c0_12 = arith.constant 0 : index
      %c0_13 = arith.constant 0 : index
      %22 = vector.load %arg12[%c0_12, %c0_13] : memref<4x1xf32, #tpu.memory_space<vmem>>, vector<4x1xf32>
      %cst = arith.constant dense<0.000000e+00> : vector<4xf32>
      %23 = vector.multi_reduction <add>, %5, %cst [1] : vector<4x256xf32> to vector<4xf32>
      %24 = vector.shape_cast %23 : vector<4xf32> to vector<4x1xf32>
      %25 = arith.addf %22, %24 : vector<4x1xf32>
      %c0_14 = arith.constant 0 : index
      %c0_15 = arith.constant 0 : index
      %26 = vector.load %arg12[%c0_14, %c0_15] : memref<4x1xf32, #tpu.memory_space<vmem>>, vector<4x1xf32>
      tpu.vector_store %arg12[%c0_14, %c0_15], %25 {strides = array<i32>} : memref<4x1xf32, #tpu.memory_space<vmem>>, vector<4x1xf32>,
      %c0_16 = arith.constant 0 : index
      %c0_17 = arith.constant 0 : index
      %27 = vector.load %arg13[%c0_16, %c0_17] : memref<4x1xf32, #tpu.memory_space<vmem>>, vector<4x1xf32>
      %28 = arith.mulf %5, %5 : vector<4x256xf32>
      %cst_18 = arith.constant dense<0.000000e+00> : vector<4xf32>
      %29 = vector.multi_reduction <add>, %28, %cst_18 [1] : vector<4x256xf32> to vector<4xf32>
      %30 = vector.shape_cast %29 : vector<4xf32> to vector<4x1xf32>
      %31 = arith.addf %27, %30 : vector<4x1xf32>
      %c0_19 = arith.constant 0 : index
      %c0_20 = arith.constant 0 : index
      %32 = vector.load %arg13[%c0_19, %c0_20] : memref<4x1xf32, #tpu.memory_space<vmem>>, vector<4x1xf32>
      tpu.vector_store %arg13[%c0_19, %c0_20], %31 {strides = array<i32>} : memref<4x1xf32, #tpu.memory_space<vmem>>, vector<4x1xf32>,
    } else {
    }
    %c0_i32_5 = arith.constant 0 : i32
    %9 = arith.cmpi eq, %arg0, %c0_i32_5 : i32
    %c1_i32 = arith.constant 1 : i32
    %10 = arith.cmpi eq, %arg1, %c1_i32 : i32
    %11 = arith.andi %9, %10 : i1
    %12 = arith.extui %11 : i1 to i32
    %c0_i32_6 = arith.constant 0 : i32
    %13 = arith.cmpi ne, %12, %c0_i32_6 : i32
    scf.if %13 {
      %c0_12 = arith.constant 0 : index
      %c0_13 = arith.constant 0 : index
      %22 = vector.load %arg12[%c0_12, %c0_13] : memref<4x1xf32, #tpu.memory_space<vmem>>, vector<4x1xf32>
      %cst = arith.constant 0.001953125 : f32
      %23 = vector.broadcast %cst : f32 to vector<4x1xf32>
      %24 = arith.mulf %22, %23 : vector<4x1xf32>
      %c0_14 = arith.constant 0 : index
      %c0_15 = arith.constant 0 : index
      %25 = vector.load %arg13[%c0_14, %c0_15] : memref<4x1xf32, #tpu.memory_space<vmem>>, vector<4x1xf32>
      %cst_16 = arith.constant 0.001953125 : f32
      %26 = vector.broadcast %cst_16 : f32 to vector<4x1xf32>
      %27 = arith.mulf %25, %26 : vector<4x1xf32>
      %28 = arith.mulf %24, %24 : vector<4x1xf32>
      %29 = arith.subf %27, %28 : vector<4x1xf32>
      %c0_17 = arith.constant 0 : index
      %c0_18 = arith.constant 0 : index
      %30 = vector.load %arg3[%c0_17, %c0_18] : memref<4x1xf32, #tpu.memory_space<vmem>>, vector<4x1xf32>
      %cst_19 = arith.constant 9.99999974E-6 : f32
      %31 = vector.broadcast %cst_19 : f32 to vector<4x1xf32>
      %32 = arith.addf %29, %31 : vector<4x1xf32>
      %33 = math.rsqrt %32 : vector<4x1xf32>
      %34 = arith.mulf %30, %33 : vector<4x1xf32>
      %c0_20 = arith.constant 0 : index
      %c0_21 = arith.constant 0 : index
      %35 = vector.load %arg8[%c0_20, %c0_21] : memref<4x1xf32, #tpu.memory_space<vmem>>, vector<4x1xf32>
      tpu.vector_store %arg8[%c0_20, %c0_21], %34 {strides = array<i32>} : memref<4x1xf32, #tpu.memory_space<vmem>>, vector<4x1xf32>,
      %c0_22 = arith.constant 0 : index
      %c0_23 = arith.constant 0 : index
      %36 = vector.load %arg4[%c0_22, %c0_23] : memref<4x1xf32, #tpu.memory_space<vmem>>, vector<4x1xf32>
      %37 = arith.mulf %24, %34 : vector<4x1xf32>
      %38 = arith.subf %36, %37 : vector<4x1xf32>
      %c0_24 = arith.constant 0 : index
      %c0_25 = arith.constant 0 : index
      %39 = vector.load %arg9[%c0_24, %c0_25] : memref<4x1xf32, #tpu.memory_space<vmem>>, vector<4x1xf32>
      tpu.vector_store %arg9[%c0_24, %c0_25], %38 {strides = array<i32>} : memref<4x1xf32, #tpu.memory_space<vmem>>, vector<4x1xf32>,
    } else {
    }
    %c1_i32_7 = arith.constant 1 : i32
    %14 = arith.cmpi eq, %arg0, %c1_i32_7 : i32
    %15 = arith.extui %14 : i1 to i32
    %c0_i32_8 = arith.constant 0 : i32
    %16 = arith.cmpi ne, %15, %c0_i32_8 : i32
    scf.if %16 {
      %c0_12 = arith.constant 0 : index
      %c0_13 = arith.constant 0 : index
      %22 = vector.load %arg8[%c0_12, %c0_13] : memref<4x1xf32, #tpu.memory_space<vmem>>, vector<4x1xf32>
      %23 = vector.broadcast %22 : vector<4x1xf32> to vector<4x256xf32>
      %24 = arith.mulf %5, %23 : vector<4x256xf32>
      %c0_14 = arith.constant 0 : index
      %c0_15 = arith.constant 0 : index
      %25 = vector.load %arg9[%c0_14, %c0_15] : memref<4x1xf32, #tpu.memory_space<vmem>>, vector<4x1xf32>
      %26 = vector.broadcast %25 : vector<4x1xf32> to vector<4x256xf32>
      %27 = arith.addf %24, %26 : vector<4x256xf32>
      %cst = arith.constant 0.000000e+00 : f32
      %28 = vector.broadcast %cst : f32 to vector<4x256xf32>
      %29 = arith.maximumf %27, %28 : vector<4x256xf32>
      %c0_16 = arith.constant 0 : index
      %c0_17 = arith.constant 0 : index
      %30 = vector.load %arg5[%c0_16, %c0_17] : memref<32x4xf32, #tpu.memory_space<vmem>>, vector<32x4xf32>
      %cst_18 = arith.constant dense<0.000000e+00> : vector<32x256xf32>
      %31 = tpu.matmul %30, %29, %cst_18 {dimension_numbers = #tpu.dot_dimension_numbers<[1], [0], [0], [1], [0, 0, 1, 1], [], []>} : vector<32x4xf32>, vector<4x256xf32>, vector<32x256xf32> -> vector<32x256xf32>
      %c0_19 = arith.constant 0 : index
      %c0_20 = arith.constant 0 : index
      %32 = vector.load %arg14[%c0_19, %c0_20] : memref<32x1xf32, #tpu.memory_space<vmem>>, vector<32x1xf32>
      %cst_21 = arith.constant dense<0.000000e+00> : vector<32xf32>
      %33 = vector.multi_reduction <add>, %31, %cst_21 [1] : vector<32x256xf32> to vector<32xf32>
      %34 = vector.shape_cast %33 : vector<32xf32> to vector<32x1xf32>
      %35 = arith.addf %32, %34 : vector<32x1xf32>
      %c0_22 = arith.constant 0 : index
      %c0_23 = arith.constant 0 : index
      %36 = vector.load %arg14[%c0_22, %c0_23] : memref<32x1xf32, #tpu.memory_space<vmem>>, vector<32x1xf32>
      tpu.vector_store %arg14[%c0_22, %c0_23], %35 {strides = array<i32>} : memref<32x1xf32, #tpu.memory_space<vmem>>, vector<32x1xf32>,
      %c0_24 = arith.constant 0 : index
      %c0_25 = arith.constant 0 : index
      %37 = vector.load %arg15[%c0_24, %c0_25] : memref<32x1xf32, #tpu.memory_space<vmem>>, vector<32x1xf32>
      %38 = arith.mulf %31, %31 : vector<32x256xf32>
      %cst_26 = arith.constant dense<0.000000e+00> : vector<32xf32>
      %39 = vector.multi_reduction <add>, %38, %cst_26 [1] : vector<32x256xf32> to vector<32xf32>
      %40 = vector.shape_cast %39 : vector<32xf32> to vector<32x1xf32>
      %41 = arith.addf %37, %40 : vector<32x1xf32>
      %c0_27 = arith.constant 0 : index
      %c0_28 = arith.constant 0 : index
      %42 = vector.load %arg15[%c0_27, %c0_28] : memref<32x1xf32, #tpu.memory_space<vmem>>, vector<32x1xf32>
      tpu.vector_store %arg15[%c0_27, %c0_28], %41 {strides = array<i32>} : memref<32x1xf32, #tpu.memory_space<vmem>>, vector<32x1xf32>,
    } else {
    }
    %c1_i32_9 = arith.constant 1 : i32
    %17 = arith.cmpi eq, %arg0, %c1_i32_9 : i32
    %c1_i32_10 = arith.constant 1 : i32
    %18 = arith.cmpi eq, %arg1, %c1_i32_10 : i32
    %19 = arith.andi %17, %18 : i1
    %20 = arith.extui %19 : i1 to i32
    %c0_i32_11 = arith.constant 0 : i32
    %21 = arith.cmpi ne, %20, %c0_i32_11 : i32
    scf.if %21 {
      %c0_12 = arith.constant 0 : index
      %c0_13 = arith.constant 0 : index
      %22 = vector.load %arg14[%c0_12, %c0_13] : memref<32x1xf32, #tpu.memory_space<vmem>>, vector<32x1xf32>
      %cst = arith.constant 0.001953125 : f32
      %23 = vector.broadcast %cst : f32 to vector<32x1xf32>
      %24 = arith.mulf %22, %23 : vector<32x1xf32>
      %c0_14 = arith.constant 0 : index
      %c0_15 = arith.constant 0 : index
      %25 = vector.load %arg15[%c0_14, %c0_15] : memref<32x1xf32, #tpu.memory_space<vmem>>, vector<32x1xf32>
      %cst_16 = arith.constant 0.001953125 : f32
      %26 = vector.broadcast %cst_16 : f32 to vector<32x1xf32>
      %27 = arith.mulf %25, %26 : vector<32x1xf32>
      %28 = arith.mulf %24, %24 : vector<32x1xf32>
      %29 = arith.subf %27, %28 : vector<32x1xf32>
      %c0_17 = arith.constant 0 : index
      %c0_18 = arith.constant 0 : index
      %30 = vector.load %arg6[%c0_17, %c0_18] : memref<32x1xf32, #tpu.memory_space<vmem>>, vector<32x1xf32>
      %cst_19 = arith.constant 9.99999974E-6 : f32
      %31 = vector.broadcast %cst_19 : f32 to vector<32x1xf32>
      %32 = arith.addf %29, %31 : vector<32x1xf32>
      %33 = math.rsqrt %32 : vector<32x1xf32>
      %34 = arith.mulf %30, %33 : vector<32x1xf32>
      %c0_20 = arith.constant 0 : index
      %c0_21 = arith.constant 0 : index
      %35 = vector.load %arg10[%c0_20, %c0_21] : memref<32x1xf32, #tpu.memory_space<vmem>>, vector<32x1xf32>
      tpu.vector_store %arg10[%c0_20, %c0_21], %34 {strides = array<i32>} : memref<32x1xf32, #tpu.memory_space<vmem>>, vector<32x1xf32>,
      %c0_22 = arith.constant 0 : index
      %c0_23 = arith.constant 0 : index
      %36 = vector.load %arg7[%c0_22, %c0_23] : memref<32x1xf32, #tpu.memory_space<vmem>>, vector<32x1xf32>
      %37 = arith.mulf %24, %34 : vector<32x1xf32>
      %38 = arith.subf %36, %37 : vector<32x1xf32>
      %c0_24 = arith.constant 0 : index
      %c0_25 = arith.constant 0 : index
      %39 = vector.load %arg11[%c0_24, %c0_25] : memref<32x1xf32, #tpu.memory_space<vmem>>, vector<32x1xf32>
      tpu.vector_store %arg11[%c0_24, %c0_25], %38 {strides = array<i32>} : memref<32x1xf32, #tpu.memory_space<vmem>>, vector<32x1xf32>,
    } else {
    }
    return
  }
  func.func @transform_0(%arg0: i32, %arg1: i32) -> (i32, i32) {
    %c0_i32 = arith.constant 0 : i32
    %c0_i32_0 = arith.constant 0 : i32
    return %c0_i32, %arg1 : i32, i32
  }
  func.func @transform_1(%arg0: i32, %arg1: i32) -> (i32, i32) {
    %c0_i32 = arith.constant 0 : i32
    %c0_i32_0 = arith.constant 0 : i32
    %c0_i32_1 = arith.constant 0 : i32
    return %c0_i32, %c0_i32_0 : i32, i32
  }
  func.func @transform_2(%arg0: i32, %arg1: i32) -> (i32, i32) {
    %c0_i32 = arith.constant 0 : i32
    %c0_i32_0 = arith.constant 0 : i32
    %c0_i32_1 = arith.constant 0 : i32
    return %c0_i32, %c0_i32_0 : i32, i32
  }
  func.func @transform_3(%arg0: i32, %arg1: i32) -> (i32, i32) {
    %c0_i32 = arith.constant 0 : i32
    %c0_i32_0 = arith.constant 0 : i32
    %c0_i32_1 = arith.constant 0 : i32
    return %c0_i32, %c0_i32_0 : i32, i32
  }
  func.func @transform_4(%arg0: i32, %arg1: i32) -> (i32, i32) {
    %c0_i32 = arith.constant 0 : i32
    %c0_i32_0 = arith.constant 0 : i32
    %c0_i32_1 = arith.constant 0 : i32
    return %c0_i32, %c0_i32_0 : i32, i32
  }
  func.func @transform_5(%arg0: i32, %arg1: i32) -> (i32, i32) {
    %c0_i32 = arith.constant 0 : i32
    %c0_i32_0 = arith.constant 0 : i32
    %c0_i32_1 = arith.constant 0 : i32
    return %c0_i32, %c0_i32_0 : i32, i32
  }
  func.func @transform_6(%arg0: i32, %arg1: i32) -> (i32, i32) {
    %c0_i32 = arith.constant 0 : i32
    %c0_i32_0 = arith.constant 0 : i32
    %c0_i32_1 = arith.constant 0 : i32
    return %c0_i32, %c0_i32_0 : i32, i32
  }
  func.func @transform_7(%arg0: i32, %arg1: i32) -> (i32, i32) {
    %c0_i32 = arith.constant 0 : i32
    %c0_i32_0 = arith.constant 0 : i32
    %c0_i32_1 = arith.constant 0 : i32
    return %c0_i32, %c0_i32_0 : i32, i32
  }
  func.func @transform_8(%arg0: i32, %arg1: i32) -> (i32, i32) {
    %c0_i32 = arith.constant 0 : i32
    %c0_i32_0 = arith.constant 0 : i32
    %c0_i32_1 = arith.constant 0 : i32
    return %c0_i32, %c0_i32_0 : i32, i32
  }
  func.func @transform_9(%arg0: i32, %arg1: i32) -> (i32, i32) {
    %c0_i32 = arith.constant 0 : i32
    %c0_i32_0 = arith.constant 0 : i32
    %c0_i32_1 = arith.constant 0 : i32
    return %c0_i32, %c0_i32_0 : i32, i32
  }
}

</mosaic_0001>

<llo_original>
// kernel: tpu_custom_call.1
$region0: #{tpu_custom_call.1}
  #allocation0 [shape = 'u32[]', space=smem, size = 0x4, offset = 0x4, fixed_abs, tag = 'smem constant byte address 0x4 - core index']
  #allocation1 [shape = 'u32[144,128]{1,0:T(1,128)}', space=vmem, size = 0x12000, scoped, tag = 'internal scratch']
  #allocation2 [shape = 'f32[4,1]{1,0:T(4,128)}', space=vmem, size = 0x800, scoped, tag = 'scratch operand']
  #allocation3 [shape = 'f32[4,1]{1,0:T(4,128)}', space=vmem, size = 0x800, scoped, tag = 'scratch operand']
  #allocation4 [shape = 'f32[32,1]{1,0:T(8,128)}', space=vmem, size = 0x4000, scoped, tag = 'scratch operand']
  #allocation5 [shape = 'f32[32,1]{1,0:T(8,128)}', space=vmem, size = 0x4000, scoped, tag = 'scratch operand']
  %s0 = inlined_call_operand.vmem [shape: f32[4,512], index: 0, kind: input, shape index: {}]
  %s1 = inlined_call_operand.vmem [shape: f32[4,1], index: 1, kind: input, shape index: {}]
  %s2 = inlined_call_operand.vmem [shape: f32[4,1], index: 2, kind: input, shape index: {}]
  %s3 = inlined_call_operand.vmem [shape: f32[32,4], index: 3, kind: input, shape index: {}]
  %s4 = inlined_call_operand.vmem [shape: f32[32,1], index: 4, kind: input, shape index: {}]
  %s5 = inlined_call_operand.vmem [shape: f32[32,1], index: 5, kind: input, shape index: {}]
  %s6 = inlined_call_operand.vmem [shape: f32[4,1], index: 6, kind: output, shape index: {0}]
  %s7 = inlined_call_operand.vmem [shape: f32[4,1], index: 7, kind: output, shape index: {1}]
  %s8 = inlined_call_operand.vmem [shape: f32[32,1], index: 8, kind: output, shape index: {2}]
  %s9 = inlined_call_operand.vmem [shape: f32[32,1], index: 9, kind: output, shape index: {3}]
  %10 = xla_tuple %s6, %s7, %s8, %s9
  %s11 = sld [smem:[#allocation0]]
  $region101: #{tpu_custom_call.1} parent=0
    _
  %s13 = ssub.s32 1, %s11
  %s14 = scalar_select 0, %s13, %s11
  loop: start=0, step=1, limit=6
  $region2: #{tpu_custom_call.1} parent=0 // loop_pre_header
    _
  $region3: #{tpu_custom_call.1} parent=0 // loop_header
    %s16 = sphi 0, %s20
    %p17 = scmp.ge.s32.totalorder %s16, 6
    %s23 = sphi 0, %s35
    %s24 = sphi 0, %s31
    %s25 = sphi 0, %s23
    %s26 = sphi 0, %s24
    %s27 = sphi 0, %s25
    %s28 = sphi 0, %s26
    %s38 = sphi 0, %s40
    %s41 = sphi 0, %s38
    %s42 = sphi 0, %s41
    %s58 = sphi 0, %s42
    %s62 = sphi 0, %s62
    %s64 = sphi 0, %s62
    %s65 = sphi 0, %s64
    %s79 = sphi 0, %s65
    %s83 = sphi 0, %s83
    %s85 = sphi 0, %s83
    %s86 = sphi 0, %s85
    %s100 = sphi 0, %s86
    %s104 = sphi 0, %s104
    %s106 = sphi 0, %s104
    %s107 = sphi 0, %s106
    %s121 = sphi 0, %s107
    %s125 = sphi 0, %s125
    %s127 = sphi 0, %s125
    %s128 = sphi 0, %s127
    %s142 = sphi 0, %s128
    %s146 = sphi 0, %s146
    %s148 = sphi 0, %s146
    %s149 = sphi 0, %s148
    %s163 = sphi 0, %s149
    %s167 = sphi 0, %s167
    %s169 = sphi 0, %s167
    %s170 = sphi 0, %s169
    %s184 = sphi 0, %s170
    %s188 = sphi 0, %s188
    %s190 = sphi 0, %s188
    %s191 = sphi 0, %s190
    %s205 = sphi 0, %s191
    %s209 = sphi 0, %s209
    %s211 = sphi 0, %s209
    %s212 = sphi 0, %s211
    %s226 = sphi 0, %s212
    %s230 = sphi 0, %s230
    %s232 = sphi 0, %s230
    %s233 = sphi 0, %s232
    %s247 = sphi 0, %s233
  $region4: #{tpu_custom_call.1} parent=0 // loop_header_branch
    %19 = sbr.rel (%p17) target = $region8
  $region5: #{tpu_custom_call.1} parent=0 // loop_body
    %s21 = ssub.s32 %s16, 1
    %s22 = ssub.s32 %s16, 2
    %s29 = sadd.s32 1, %s24
    %p30 = scmp.ge.s32.totalorder %s29, 2
    %s31 = scalar_select %p30, 0, %s29
    %s32 = sadd.s32 1, %s23
    %s33 = scalar_select %p30, %s32, %s23
    %p34 = scmp.ge.s32.totalorder %s33, 2
    %s35 = scalar_select %p34, 0, %s33
    %s36 = ssub.s32 %s24, %s31
    %p37 = scmp.eq.s32.totalorder %s36, 0
    %s39 = sadd.s32 %s38, 1
    %s40 = scalar_select %p37, %s38, %s39
    %p43 = pneg %p37
    %p44 = scmp.eq.s32.totalorder %s16, 3
    %p45 = por %p43, %p44
    %p46 = scmp.ne.s32.totalorder %s38, %s41
    %p47 = scmp.eq.s32.totalorder %s16, 0
    %p48 = por %p46, %p47
    %p49 = scmp.ne.s32.totalorder %s38, %s41
    %p50 = scmp.eq.s32.totalorder %s21, 3
    %p51 = por %p49, %p50
    %p52 = scmp.ne.s32.totalorder %s41, %s42
    %p53 = scmp.eq.s32.totalorder %s21, 0
    %p54 = por %p52, %p53
    %p55 = scmp.ne.s32.totalorder %s41, %s42
    %p56 = scmp.eq.s32.totalorder %s22, 3
    %p57 = por %p55, %p56
    %p59 = scmp.ne.s32.totalorder %s42, %s58
    %p60 = scmp.eq.s32.totalorder %s22, 0
    %p61 = por %p59, %p60
    %s63 = sadd.s32 %s62, 1
    %p66 = scmp.eq.s32.totalorder %s16, 3
    %p67 = scmp.ne.s32.totalorder %s62, %s64
    %p68 = scmp.eq.s32.totalorder %s16, 0
    %p69 = por %p67, %p68
    %p70 = scmp.ne.s32.totalorder %s62, %s64
    %p71 = scmp.eq.s32.totalorder %s21, 3
    %p72 = por %p70, %p71
    %p73 = scmp.ne.s32.totalorder %s64, %s65
    %p74 = scmp.eq.s32.totalorder %s21, 0
    %p75 = por %p73, %p74
    %p76 = scmp.ne.s32.totalorder %s64, %s65
    %p77 = scmp.eq.s32.totalorder %s22, 3
    %p78 = por %p76, %p77
    %p80 = scmp.ne.s32.totalorder %s65, %s79
    %p81 = scmp.eq.s32.totalorder %s22, 0
    %p82 = por %p80, %p81
    %s84 = sadd.s32 %s83, 1
    %p87 = scmp.eq.s32.totalorder %s16, 3
    %p88 = scmp.ne.s32.totalorder %s83, %s85
    %p89 = scmp.eq.s32.totalorder %s16, 0
    %p90 = por %p88, %p89
    %p91 = scmp.ne.s32.totalorder %s83, %s85
    %p92 = scmp.eq.s32.totalorder %s21, 3
    %p93 = por %p91, %p92
    %p94 = scmp.ne.s32.totalorder %s85, %s86
    %p95 = scmp.eq.s32.totalorder %s21, 0
    %p96 = por %p94, %p95
    %p97 = scmp.ne.s32.totalorder %s85, %s86
    %p98 = scmp.eq.s32.totalorder %s22, 3
    %p99 = por %p97, %p98
    %p101 = scmp.ne.s32.totalorder %s86, %s100
    %p102 = scmp.eq.s32.totalorder %s22, 0
    %p103 = por %p101, %p102
    %s105 = sadd.s32 %s104, 1
    %p108 = scmp.eq.s32.totalorder %s16, 3
    %p109 = scmp.ne.s32.totalorder %s104, %s106
    %p110 = scmp.eq.s32.totalorder %s16, 0
    %p111 = por %p109, %p110
    %p112 = scmp.ne.s32.totalorder %s104, %s106
    %p113 = scmp.eq.s32.totalorder %s21, 3
    %p114 = por %p112, %p113
    %p115 = scmp.ne.s32.totalorder %s106, %s107
    %p116 = scmp.eq.s32.totalorder %s21, 0
    %p117 = por %p115, %p116
    %p118 = scmp.ne.s32.totalorder %s106, %s107
    %p119 = scmp.eq.s32.totalorder %s22, 3
    %p120 = por %p118, %p119
    %p122 = scmp.ne.s32.totalorder %s107, %s121
    %p123 = scmp.eq.s32.totalorder %s22, 0
    %p124 = por %p122, %p123
    %s126 = sadd.s32 %s125, 1
    %p129 = scmp.eq.s32.totalorder %s16, 3
    %p130 = scmp.ne.s32.totalorder %s125, %s127
    %p131 = scmp.eq.s32.totalorder %s16, 0
    %p132 = por %p130, %p131
    %p133 = scmp.ne.s32.totalorder %s125, %s127
    %p134 = scmp.eq.s32.totalorder %s21, 3
    %p135 = por %p133, %p134
    %p136 = scmp.ne.s32.totalorder %s127, %s128
    %p137 = scmp.eq.s32.totalorder %s21, 0
    %p138 = por %p136, %p137
    %p139 = scmp.ne.s32.totalorder %s127, %s128
    %p140 = scmp.eq.s32.totalorder %s22, 3
    %p141 = por %p139, %p140
    %p143 = scmp.ne.s32.totalorder %s128, %s142
    %p144 = scmp.eq.s32.totalorder %s22, 0
    %p145 = por %p143, %p144
    %s147 = sadd.s32 %s146, 1
    %p150 = scmp.eq.s32.totalorder %s16, 3
    %p151 = scmp.ne.s32.totalorder %s146, %s148
    %p152 = scmp.eq.s32.totalorder %s16, 0
    %p153 = por %p151, %p152
    %p154 = scmp.ne.s32.totalorder %s146, %s148
    %p155 = scmp.eq.s32.totalorder %s21, 3
    %p156 = por %p154, %p155
    %p157 = scmp.ne.s32.totalorder %s148, %s149
    %p158 = scmp.eq.s32.totalorder %s21, 0
    %p159 = por %p157, %p158
    %p160 = scmp.ne.s32.totalorder %s148, %s149
    %p161 = scmp.eq.s32.totalorder %s22, 3
    %p162 = por %p160, %p161
    %p164 = scmp.ne.s32.totalorder %s149, %s163
    %p165 = scmp.eq.s32.totalorder %s22, 0
    %p166 = por %p164, %p165
    %s168 = sadd.s32 %s167, 1
    %p171 = scmp.eq.s32.totalorder %s16, 3
    %p172 = scmp.ne.s32.totalorder %s167, %s169
    %p173 = scmp.eq.s32.totalorder %s16, 0
    %p174 = por %p172, %p173
    %p175 = scmp.ne.s32.totalorder %s167, %s169
    %p176 = scmp.eq.s32.totalorder %s21, 3
    %p177 = por %p175, %p176
    %p178 = scmp.ne.s32.totalorder %s169, %s170
    %p179 = scmp.eq.s32.totalorder %s21, 0
    %p180 = por %p178, %p179
    %p181 = scmp.ne.s32.totalorder %s169, %s170
    %p182 = scmp.eq.s32.totalorder %s22, 3
    %p183 = por %p181, %p182
    %p185 = scmp.ne.s32.totalorder %s170, %s184
    %p186 = scmp.eq.s32.totalorder %s22, 0
    %p187 = por %p185, %p186
    %s189 = sadd.s32 %s188, 1
    %p192 = scmp.eq.s32.totalorder %s16, 3
    %p193 = scmp.ne.s32.totalorder %s188, %s190
    %p194 = scmp.eq.s32.totalorder %s16, 0
    %p195 = por %p193, %p194
    %p196 = scmp.ne.s32.totalorder %s188, %s190
    %p197 = scmp.eq.s32.totalorder %s21, 3
    %p198 = por %p196, %p197
    %p199 = scmp.ne.s32.totalorder %s190, %s191
    %p200 = scmp.eq.s32.totalorder %s21, 0
    %p201 = por %p199, %p200
    %p202 = scmp.ne.s32.totalorder %s190, %s191
    %p203 = scmp.eq.s32.totalorder %s22, 3
    %p204 = por %p202, %p203
    %p206 = scmp.ne.s32.totalorder %s191, %s205
    %p207 = scmp.eq.s32.totalorder %s22, 0
    %p208 = por %p206, %p207
    %s210 = sadd.s32 %s209, 1
    %p213 = scmp.eq.s32.totalorder %s16, 3
    %p214 = scmp.ne.s32.totalorder %s209, %s211
    %p215 = scmp.eq.s32.totalorder %s16, 0
    %p216 = por %p214, %p215
    %p217 = scmp.ne.s32.totalorder %s209, %s211
    %p218 = scmp.eq.s32.totalorder %s21, 3
    %p219 = por %p217, %p218
    %p220 = scmp.ne.s32.totalorder %s211, %s212
    %p221 = scmp.eq.s32.totalorder %s21, 0
    %p222 = por %p220, %p221
    %p223 = scmp.ne.s32.totalorder %s211, %s212
    %p224 = scmp.eq.s32.totalorder %s22, 3
    %p225 = por %p223, %p224
    %p227 = scmp.ne.s32.totalorder %s212, %s226
    %p228 = scmp.eq.s32.totalorder %s22, 0
    %p229 = por %p227, %p228
    %s231 = sadd.s32 %s230, 1
    %p234 = scmp.eq.s32.totalorder %s16, 3
    %p235 = scmp.ne.s32.totalorder %s230, %s232
    %p236 = scmp.eq.s32.totalorder %s16, 0
    %p237 = por %p235, %p236
    %p238 = scmp.ne.s32.totalorder %s230, %s232
    %p239 = scmp.eq.s32.totalorder %s21, 3
    %p240 = por %p238, %p239
    %p241 = scmp.ne.s32.totalorder %s232, %s233
    %p242 = scmp.eq.s32.totalorder %s21, 0
    %p243 = por %p241, %p242
    %p244 = scmp.ne.s32.totalorder %s232, %s233
    %p245 = scmp.eq.s32.totalorder %s22, 3
    %p246 = por %p244, %p245
    %p248 = scmp.ne.s32.totalorder %s233, %s247
    %p249 = scmp.eq.s32.totalorder %s22, 0
    %p250 = por %p248, %p249
    %p251 = scmp.le.s32.totalorder 1, %s16
    %p252 = scmp.lt.s32.totalorder %s16, 5
    %p253 = pnand %p251, %p252
    %p254 = pneg %p253
    // Predicated region
    $region9: #{tpu_custom_call.1} parent=5 // pred_check
      _
    $region10: #{tpu_custom_call.1} parent=5 // pred_check_branch
      %256 = sbr.rel (%p253) target = $region12
    $region11: #{tpu_custom_call.1} parent=5 // pred_region
      %s257 = ssub.s32 %s16, 1
      // Predicated region
      $region13: #{tpu_custom_call.1} parent=11 // pred_check
        %p258 = pneg %p75
      $region14: #{tpu_custom_call.1} parent=11 // pred_check_branch
        %260 = sbr.rel (%p258) target = $region16
      $region15: #{tpu_custom_call.1} parent=11 // pred_region
        _
      $region16: #{tpu_custom_call.1} parent=11 // pred_fallthru
        _
      // Predicated region
      $region17: #{tpu_custom_call.1} parent=11 // pred_check
        %p261 = pneg %p96
      $region18: #{tpu_custom_call.1} parent=11 // pred_check_branch
        %263 = sbr.rel (%p261) target = $region20
      $region19: #{tpu_custom_call.1} parent=11 // pred_region
        _
      $region20: #{tpu_custom_call.1} parent=11 // pred_fallthru
        _
      // Predicated region
      $region21: #{tpu_custom_call.1} parent=11 // pred_check
        %p264 = pneg %p117
      $region22: #{tpu_custom_call.1} parent=11 // pred_check_branch
        %266 = sbr.rel (%p264) target = $region24
      $region23: #{tpu_custom_call.1} parent=11 // pred_region
        _
      $region24: #{tpu_custom_call.1} parent=11 // pred_fallthru
        _
      // Predicated region
      $region25: #{tpu_custom_call.1} parent=11 // pred_check
        %p267 = pneg %p138
      $region26: #{tpu_custom_call.1} parent=11 // pred_check_branch
        %269 = sbr.rel (%p267) target = $region28
      $region27: #{tpu_custom_call.1} parent=11 // pred_region
        _
      $region28: #{tpu_custom_call.1} parent=11 // pred_fallthru
        _
      // Predicated region
      $region29: #{tpu_custom_call.1} parent=11 // pred_check
        %p270 = pneg %p159
      $region30: #{tpu_custom_call.1} parent=11 // pred_check_branch
        %272 = sbr.rel (%p270) target = $region32
      $region31: #{tpu_custom_call.1} parent=11 // pred_region
        _
      $region32: #{tpu_custom_call.1} parent=11 // pred_fallthru
        _
    $region12: #{tpu_custom_call.1} parent=5 // pred_fallthru
      _
    %p273 = scmp.lt.s32.totalorder %s16, 4
    // Predicated region
    $region33: #{tpu_custom_call.1} parent=5 // pred_check
      %p274 = pneg %p273
    $region34: #{tpu_custom_call.1} parent=5 // pred_check_branch
      %276 = sbr.rel (%p274) target = $region36
    $region35: #{tpu_custom_call.1} parent=5 // pred_region
      // Predicated region
      $region37: #{tpu_custom_call.1} parent=35 // pred_check
        %p277 = pneg %p48
      $region38: #{tpu_custom_call.1} parent=35 // pred_check_branch
        %279 = sbr.rel (%p277) target = $region40
      $region39: #{tpu_custom_call.1} parent=35 // pred_region
        %s280 = smul.u32 2, %s24
        %p281 = scmp.lt.s32.totalorder %s280, 3
        %s282 = scalar_select %p281, %s280, 3
        %s283 = smul.addr %s282, 4
        %s284 = scalar_lea.vmem %s0, %s283
        %s285 = smul.u32 2, %s24
      $region40: #{tpu_custom_call.1} parent=35 // pred_fallthru
        _
    $region36: #{tpu_custom_call.1} parent=5 // pred_fallthru
      _
    %p286 = scmp.le.s32.totalorder 1, %s16
    %p287 = scmp.lt.s32.totalorder %s16, 5
    %p288 = pnand %p286, %p287
    %p289 = pneg %p288
    // Predicated region
    $region41: #{tpu_custom_call.1} parent=5 // pred_check
      _
    $region42: #{tpu_custom_call.1} parent=5 // pred_check_branch
      %291 = sbr.rel (%p288) target = $region44
    $region43: #{tpu_custom_call.1} parent=5 // pred_region
      %s292 = ssub.s32 %s16, 1
      %s293 = smul.u32 2, %s26
      %p294 = scmp.lt.s32.totalorder %s293, 3
      %s295 = scalar_select %p294, %s293, 3
      %s296 = smul.addr %s295, 4
      %s297 = scalar_lea.vmem %s0, %s296
      %p298 = pneg %p54
      %p299 = pneg %p51
      %p300 = pneg %p75
      %p301 = pneg %p72
      %p302 = pneg %p96
      %p303 = pneg %p93
      %p304 = pneg %p117
      %p305 = pneg %p114
      %p306 = pneg %p138
      %p307 = pneg %p135
      %p308 = pneg %p159
      %p309 = pneg %p156
      %p310 = pneg %p180
      %p311 = pneg %p177
      %p312 = pneg %p201
      %p313 = pneg %p198
      %p314 = pneg %p222
      %p315 = pneg %p219
      %p316 = pneg %p243
      %p317 = pneg %p240
      %s318 = smul.u32 2, %s26
      %p319 = scmp.lt.s32.totalorder %s318, 3
      %s320 = scalar_select %p319, %s318, 3
      %s321 = smul.addr %s320, 4
      %s322 = scalar_lea.vmem %s0, %s321
      %s323 = smul.u32 2, %s26
      %p324 = scmp.eq.s32.totalorder %s25, 0
      %p325 = scmp.eq.s32.totalorder %s26, 0
      %p326 = pnand %p324, %p325
      %p327 = pneg %p326
      // Predicated region
      $region45: #{tpu_custom_call.1} parent=43 // pred_check
        _
      $region46: #{tpu_custom_call.1} parent=43 // pred_check_branch
        %329 = sbr.rel (%p326) target = $region48
      $region47: #{tpu_custom_call.1} parent=43 // pred_region
        %vm330 = vcmask 3072
        %331 = vst.msk [vmem:[#allocation2] sm:$0xf] %vm330, 0.0
        %332 = vst.msk [vmem:[#allocation3] sm:$0xf] %vm330, 0.0
        %vm333 = vcmask 7168
        %334 = vst.msk [vmem:[#allocation4] sm:$0xff] %vm333, 0.0
        %335 = vst.msk [vmem:[#allocation4 + $0x8] sm:$0xff] %vm333, 0.0
        %336 = vst.msk [vmem:[#allocation4 + $0x10] sm:$0xff] %vm333, 0.0
        %337 = vst.msk [vmem:[#allocation4 + $0x18] sm:$0xff] %vm333, 0.0
        %338 = vst.msk [vmem:[#allocation5] sm:$0xff] %vm333, 0.0
        %339 = vst.msk [vmem:[#allocation5 + $0x8] sm:$0xff] %vm333, 0.0
        %340 = vst.msk [vmem:[#allocation5 + $0x10] sm:$0xff] %vm333, 0.0
        %341 = vst.msk [vmem:[#allocation5 + $0x18] sm:$0xff] %vm333, 0.0
      $region48: #{tpu_custom_call.1} parent=43 // pred_fallthru
        _
      %v342 = vld [vmem:[%s322] sm:$0xff]
      // Predicated region
      $region49: #{tpu_custom_call.1} parent=43 // pred_check
        %p343 = pneg %p324
      $region50: #{tpu_custom_call.1} parent=43 // pred_check_branch
        %345 = sbr.rel (%p343) target = $region52
      $region51: #{tpu_custom_call.1} parent=43 // pred_region
        %v346 = vld [vmem:[#allocation2] sm:$0xf]
        %v348 = vcombine.high %v342, %v342
        %vm350 = vcmask 1043456
        %v351 = vsel %vm350, %v342, 0.0
        %v352 = vsel %vm350, %v348, 0.0
        %v353 = vadd.f32 %v351, %v352
        %354 = vadd.xlane.f32.xlu0 %v353
        %v355 = vpop.xlane.xlu0 %354
        %v356 = vadd.f32 %v346, %v355
        %vm357 = vcmask 3072
        %358 = vst.msk [vmem:[#allocation2] sm:$0xf] %vm357, %v356
        %v359 = vld [vmem:[#allocation3] sm:$0xf]
        %v360 = vmul.f32 %v342, %v342
        %v362 = vcombine.high %v360, %v360
        %v364 = vsel %vm350, %v360, 0.0
        %v365 = vsel %vm350, %v362, 0.0
        %v366 = vadd.f32 %v364, %v365
        %367 = vadd.xlane.f32.xlu0 %v366
        %v368 = vpop.xlane.xlu0 %367
        %v369 = vadd.f32 %v359, %v368
        %370 = vst.msk [vmem:[#allocation3] sm:$0xf] %vm357, %v369
      $region52: #{tpu_custom_call.1} parent=43 // pred_fallthru
        _
      %p371 = scmp.eq.s32.totalorder %s26, 1
      %p372 = pnand %p324, %p371
      %p373 = pneg %p372
      // Predicated region
      $region53: #{tpu_custom_call.1} parent=43 // pred_check
        _
      $region54: #{tpu_custom_call.1} parent=43 // pred_check_branch
        %375 = sbr.rel (%p372) target = $region56
      $region55: #{tpu_custom_call.1} parent=43 // pred_region
        %v376 = vld [vmem:[#allocation2] sm:$0xf]
        %v377 = vmul.f32 %v376, 0.001953125
        %v378 = vld [vmem:[#allocation3] sm:$0xf]
        %v379 = vmul.f32 %v378, 0.001953125
        %v380 = vmul.f32 %v377, %v377
        %v381 = vsub.f32 %v379, %v380
        %v382 = vld [vmem:[%s1] sm:$0xf]
        %v383 = vadd.f32 %v381, 1e-05
        %v384 = vrsqrt.pop %v383
        %v385 = vmul.f32 %v382, %v384
        %vm386 = vcmask 3072
        %387 = vst.msk [vmem:[%s6] sm:$0xf] %vm386, %v385
        %v388 = vld [vmem:[%s2] sm:$0xf]
        %v389 = vmul.f32 %v377, %v385
        %v390 = vsub.f32 %v388, %v389
        %391 = vst.msk [vmem:[%s7] sm:$0xf] %vm386, %v390
      $region56: #{tpu_custom_call.1} parent=43 // pred_fallthru
        _
      %p392 = scmp.eq.s32.totalorder %s25, 1
      // Predicated region
      $region57: #{tpu_custom_call.1} parent=43 // pred_check
        %p393 = pneg %p392
      $region58: #{tpu_custom_call.1} parent=43 // pred_check_branch
        %395 = sbr.rel (%p393) target = $region60
      $region59: #{tpu_custom_call.1} parent=43 // pred_region
        %v396 = vld [vmem:[%s6] sm:$0xf]
        %398 = vset.pattern.permute.xlu0 0
        %399 = vperm.xlu0 %398, %v396
        %v400 = vpop.permute.xlu0 %399
        %v402 = vunpack.c.l.s4 839922192
        %v403 = vunpack.c.0.s8 %v402
        %v404 = vlaneseq
        %v405 = vshrl.u32 %v404, 7
        %v406 = vsub.s32 %v403, %v405
        %v407 = vrot.slane %v400, %v406
        %v409 = vmul.f32 %v342, %v407
        %v410 = vld [vmem:[%s7] sm:$0xf]
        %412 = vset.pattern.permute.xlu0 0
        %413 = vperm.xlu0 %412, %v410
        %v414 = vpop.permute.xlu0 %413
        %v416 = vunpack.c.l.s4 839922192
        %v417 = vunpack.c.0.s8 %v416
        %v418 = vlaneseq
        %v419 = vshrl.u32 %v418, 7
        %v420 = vsub.s32 %v417, %v419
        %v421 = vrot.slane %v414, %v420
        %v423 = vadd.f32 %v409, %v421
        %v424 = vmax.f32 %v423, 0.0
        %v425 = vld [vmem:[%s3] sm:$0xff]
        %v426 = vld [vmem:[%s3 + $0x8] sm:$0xff]
        %v427 = vld [vmem:[%s3 + $0x10] sm:$0xff]
        %v428 = vld [vmem:[%s3 + $0x18] sm:$0xff]
        %v430 = vcombine.high %v424, %v424
        %vm431 = vcmask 31744
        %v433 = vsel %vm431, %v425, 0
        %v436 = vsel %vm431, %v426, 0
        %v439 = vsel %vm431, %v427, 0
        %v442 = vsel %vm431, %v428, 0
        %vm444 = vcmask 1043456
        %v445 = vsel %vm444, %v424, 0
        %v447 = vsel %vm444, %v430, 0
        %449 = vmatprep.subr.mxu0 %v447
        %450 = vmatpush1.msra.mxu0 %v445
        %451 = vmatprep.subr.mxu0 0.0
        %452 = vmatpush1.msra.mxu0 0.0
        %453 = vmatprep.subr.mxu0 0.0
        %454 = vmatpush1.msra.mxu0 0.0
        %455 = vmatprep.subr.mxu0 0.0
        %456 = vmatpush1.msra.mxu0 0.0
        %457 = vmatprep.subr.mxu0 0.0
        %458 = vmatpush1.msra.mxu0 0.0
        %459 = vmatprep.subr.mxu0 0.0
        %460 = vmatpush1.msra.mxu0 0.0
        %461 = vmatprep.subr.mxu0 0.0
        %462 = vmatpush1.msra.mxu0 0.0
        %463 = vmatprep.subr.mxu0 0.0
        %464 = vmatpush1.msra.mxu0 0.0
        %465 = vmatprep.subr.mxu0 0.0
        %466 = vmatpush1.msra.mxu0 0.0
        %467 = vmatprep.subr.mxu0 0.0
        %468 = vmatpush1.msra.mxu0 0.0
        %469 = vmatprep.subr.mxu0 0.0
        %470 = vmatpush1.msra.mxu0 0.0
        %471 = vmatprep.subr.mxu0 0.0
        %472 = vmatpush1.msra.mxu0 0.0
        %473 = vmatprep.subr.mxu0 0.0
        %474 = vmatpush1.msra.mxu0 0.0
        %475 = vmatprep.subr.mxu0 0.0
        %476 = vmatpush1.msra.mxu0 0.0
        %477 = vmatprep.subr.mxu0 0.0
        %478 = vmatpush1.msra.mxu0 0.0
        %479 = vmatprep.subr.mxu0 0.0
        %480 = vmatpush1.msra.mxu0 0.0
        %481 = vmatprep.subr.mxu0 0.0
        %482 = vmatpush1.msra.mxu0 0.0
        %483 = vmatprep.subr.mxu0 0.0
        %484 = vmatpush1.msra.mxu0 0.0
        %485 = vmatprep.subr.mxu0 0.0
        %486 = vmatpush1.msra.mxu0 0.0
        %487 = vmatprep.subr.mxu0 0.0
        %488 = vmatpush1.msra.mxu0 0.0
        %489 = vmatprep.subr.mxu0 0.0
        %490 = vmatpush1.msra.mxu0 0.0
        %491 = vmatprep.subr.mxu0 0.0
        %492 = vmatpush1.msra.mxu0 0.0
        %493 = vmatprep.subr.mxu0 0.0
        %494 = vmatpush1.msra.mxu0 0.0
        %495 = vmatprep.subr.mxu0 0.0
        %496 = vmatpush1.msra.mxu0 0.0
        %497 = vmatprep.subr.mxu0 0.0
        %498 = vmatpush1.msra.mxu0 0.0
        %499 = vmatprep.subr.mxu0 0.0
        %500 = vmatpush1.msra.mxu0 0.0
        %501 = vmatprep.subr.mxu0 0.0
        %502 = vmatpush1.msra.mxu0 0.0
        %503 = vmatprep.subr.mxu0 0.0
        %504 = vmatpush1.msra.mxu0 0.0
        %505 = vmatprep.subr.mxu0 0.0
        %506 = vmatpush1.msra.mxu0 0.0
        %507 = vmatprep.subr.mxu0 0.0
        %508 = vmatpush1.msra.mxu0 0.0
        %509 = vmatprep.subr.mxu0 0.0
        %510 = vmatpush1.msra.mxu0 0.0
        %511 = vmatprep.subr.mxu0 0.0
        %512 = vmatpush1.msra.mxu0 0.0
        %513 = vmatprep.mubr.f32.mxu0 0.0
        %514 = vmatmul.mubr.f32.gmra.mrb[0].mxu0 %v433
        %v515 = vpop.f32.mrb[0].mxu0
        %v516 = vadd.f32 0.0, %v515
        %v517 = vpop.f32.mrb[0].mxu0
        %v518 = vadd.f32 0.0, %v517
        %519 = vmatprep.mubr.f32.mxu0 0.0
        %520 = vmatmul.mubr.f32.gmra.mrb[0].mxu0 %v436
        %v521 = vpop.f32.mrb[0].mxu0
        %v522 = vadd.f32 0.0, %v521
        %v523 = vpop.f32.mrb[0].mxu0
        %v524 = vadd.f32 0.0, %v523
        %525 = vmatprep.mubr.f32.mxu0 0.0
        %526 = vmatmul.mubr.f32.gmra.mrb[0].mxu0 %v439
        %v527 = vpop.f32.mrb[0].mxu0
        %v528 = vadd.f32 0.0, %v527
        %v529 = vpop.f32.mrb[0].mxu0
        %v530 = vadd.f32 0.0, %v529
        %531 = vmatprep.mubr.f32.mxu0 0.0
        %532 = vmatmul.mubr.f32.gmra.mrb[0].mxu0 %v442
        %v533 = vpop.f32.mrb[0].mxu0
        %v534 = vadd.f32 0.0, %v533
        %v535 = vpop.f32.mrb[0].mxu0
        %v536 = vadd.f32 0.0, %v535
        %537 = vdwg.mxu0
        %v538 = vld [vmem:[#allocation4] sm:$0xff]
        %v539 = vld [vmem:[#allocation4 + $0x8] sm:$0xff]
        %v540 = vld [vmem:[#allocation4 + $0x10] sm:$0xff]
        %v541 = vld [vmem:[#allocation4 + $0x18] sm:$0xff]
        %v542 = vadd.f32 %v516, %v518
        %543 = vadd.xlane.f32.xlu0 %v542
        %v544 = vpop.xlane.xlu0 %543
        %v545 = vadd.f32 %v522, %v524
        %546 = vadd.xlane.f32.xlu0 %v545
        %v547 = vpop.xlane.xlu0 %546
        %v548 = vadd.f32 %v528, %v530
        %549 = vadd.xlane.f32.xlu0 %v548
        %v550 = vpop.xlane.xlu0 %549
        %v551 = vadd.f32 %v534, %v536
        %552 = vadd.xlane.f32.xlu0 %v551
        %v553 = vpop.xlane.xlu0 %552
        %v554 = vadd.f32 %v538, %v544
        %v555 = vadd.f32 %v539, %v547
        %v556 = vadd.f32 %v540, %v550
        %v557 = vadd.f32 %v541, %v553
        %vm558 = vcmask 7168
        %559 = vst.msk [vmem:[#allocation4] sm:$0xff] %vm558, %v554
        %560 = vst.msk [vmem:[#allocation4 + $0x8] sm:$0xff] %vm558, %v555
        %561 = vst.msk [vmem:[#allocation4 + $0x10] sm:$0xff] %vm558, %v556
        %562 = vst.msk [vmem:[#allocation4 + $0x18] sm:$0xff] %vm558, %v557
        %v563 = vld [vmem:[#allocation5] sm:$0xff]
        %v564 = vld [vmem:[#allocation5 + $0x8] sm:$0xff]
        %v565 = vld [vmem:[#allocation5 + $0x10] sm:$0xff]
        %v566 = vld [vmem:[#allocation5 + $0x18] sm:$0xff]
        %v567 = vmul.f32 %v516, %v516
        %v568 = vmul.f32 %v518, %v518
        %v569 = vmul.f32 %v522, %v522
        %v570 = vmul.f32 %v524, %v524
        %v571 = vmul.f32 %v528, %v528
        %v572 = vmul.f32 %v530, %v530
        %v573 = vmul.f32 %v534, %v534
        %v574 = vmul.f32 %v536, %v536
        %v575 = vadd.f32 %v567, %v568
        %576 = vadd.xlane.f32.xlu0 %v575
        %v577 = vpop.xlane.xlu0 %576
        %v578 = vadd.f32 %v569, %v570
        %579 = vadd.xlane.f32.xlu0 %v578
        %v580 = vpop.xlane.xlu0 %579
        %v581 = vadd.f32 %v571, %v572
        %582 = vadd.xlane.f32.xlu0 %v581
        %v583 = vpop.xlane.xlu0 %582
        %v584 = vadd.f32 %v573, %v574
        %585 = vadd.xlane.f32.xlu0 %v584
        %v586 = vpop.xlane.xlu0 %585
        %v587 = vadd.f32 %v563, %v577
        %v588 = vadd.f32 %v564, %v580
        %v589 = vadd.f32 %v565, %v583
        %v590 = vadd.f32 %v566, %v586
        %591 = vst.msk [vmem:[#allocation5] sm:$0xff] %vm558, %v587
        %592 = vst.msk [vmem:[#allocation5 + $0x8] sm:$0xff] %vm558, %v588
        %593 = vst.msk [vmem:[#allocation5 + $0x10] sm:$0xff] %vm558, %v589
        %594 = vst.msk [vmem:[#allocation5 + $0x18] sm:$0xff] %vm558, %v590
      $region60: #{tpu_custom_call.1} parent=43 // pred_fallthru
        _
      %p595 = pnand %p392, %p371
      %p596 = pneg %p595
      // Predicated region
      $region61: #{tpu_custom_call.1} parent=43 // pred_check
        _
      $region62: #{tpu_custom_call.1} parent=43 // pred_check_branch
        %598 = sbr.rel (%p595) target = $region64
      $region63: #{tpu_custom_call.1} parent=43 // pred_region
        %v599 = vld [vmem:[#allocation4] sm:$0xff]
        %v600 = vld [vmem:[#allocation4 + $0x8] sm:$0xff]
        %v601 = vld [vmem:[#allocation4 + $0x10] sm:$0xff]
        %v602 = vld [vmem:[#allocation4 + $0x18] sm:$0xff]
        %v603 = vmul.f32 %v599, 0.001953125
        %v604 = vmul.f32 %v600, 0.001953125
        %v605 = vmul.f32 %v601, 0.001953125
        %v606 = vmul.f32 %v602, 0.001953125
        %v607 = vld [vmem:[#allocation5] sm:$0xff]
        %v608 = vld [vmem:[#allocation5 + $0x8] sm:$0xff]
        %v609 = vld [vmem:[#allocation5 + $0x10] sm:$0xff]
        %v610 = vld [vmem:[#allocation5 + $0x18] sm:$0xff]
        %v611 = vmul.f32 %v607, 0.001953125
        %v612 = vmul.f32 %v608, 0.001953125
        %v613 = vmul.f32 %v609, 0.001953125
        %v614 = vmul.f32 %v610, 0.001953125
        %v615 = vmul.f32 %v603, %v603
        %v616 = vmul.f32 %v604, %v604
        %v617 = vmul.f32 %v605, %v605
        %v618 = vmul.f32 %v606, %v606
        %v619 = vsub.f32 %v611, %v615
        %v620 = vsub.f32 %v612, %v616
        %v621 = vsub.f32 %v613, %v617
        %v622 = vsub.f32 %v614, %v618
        %v623 = vld [vmem:[%s4] sm:$0xff]
        %v624 = vld [vmem:[%s4 + $0x8] sm:$0xff]
        %v625 = vld [vmem:[%s4 + $0x10] sm:$0xff]
        %v626 = vld [vmem:[%s4 + $0x18] sm:$0xff]
        %v627 = vadd.f32 %v619, 1e-05
        %v628 = vadd.f32 %v620, 1e-05
        %v629 = vadd.f32 %v621, 1e-05
        %v630 = vadd.f32 %v622, 1e-05
        %v631 = vrsqrt.pop %v627
        %v632 = vrsqrt.pop %v628
        %v633 = vrsqrt.pop %v629
        %v634 = vrsqrt.pop %v630
        %v635 = vmul.f32 %v623, %v631
        %v636 = vmul.f32 %v624, %v632
        %v637 = vmul.f32 %v625, %v633
        %v638 = vmul.f32 %v626, %v634
        %vm639 = vcmask 7168
        %640 = vst.msk [vmem:[%s8] sm:$0xff] %vm639, %v635
        %641 = vst.msk [vmem:[%s8 + $0x8] sm:$0xff] %vm639, %v636
        %642 = vst.msk [vmem:[%s8 + $0x10] sm:$0xff] %vm639, %v637
        %643 = vst.msk [vmem:[%s8 + $0x18] sm:$0xff] %vm639, %v638
        %v644 = vld [vmem:[%s5] sm:$0xff]
        %v645 = vld [vmem:[%s5 + $0x8] sm:$0xff]
        %v646 = vld [vmem:[%s5 + $0x10] sm:$0xff]
        %v647 = vld [vmem:[%s5 + $0x18] sm:$0xff]
        %v648 = vmul.f32 %v603, %v635
        %v649 = vmul.f32 %v604, %v636
        %v650 = vmul.f32 %v605, %v637
        %v651 = vmul.f32 %v606, %v638
        %v652 = vsub.f32 %v644, %v648
        %v653 = vsub.f32 %v645, %v649
        %v654 = vsub.f32 %v646, %v650
        %v655 = vsub.f32 %v647, %v651
        %656 = vst.msk [vmem:[%s9] sm:$0xff] %vm639, %v652
        %657 = vst.msk [vmem:[%s9 + $0x8] sm:$0xff] %vm639, %v653
        %658 = vst.msk [vmem:[%s9 + $0x10] sm:$0xff] %vm639, %v654
        %659 = vst.msk [vmem:[%s9 + $0x18] sm:$0xff] %vm639, %v655
      $region64: #{tpu_custom_call.1} parent=43 // pred_fallthru
        _
      // Predicated region
      $region65: #{tpu_custom_call.1} parent=43 // pred_check
        %p660 = pneg %p177
      $region66: #{tpu_custom_call.1} parent=43 // pred_check_branch
        %662 = sbr.rel (%p660) target = $region68
      $region67: #{tpu_custom_call.1} parent=43 // pred_region
        _
      $region68: #{tpu_custom_call.1} parent=43 // pred_fallthru
        _
      // Predicated region
      $region69: #{tpu_custom_call.1} parent=43 // pred_check
        %p663 = pneg %p198
      $region70: #{tpu_custom_call.1} parent=43 // pred_check_branch
        %665 = sbr.rel (%p663) target = $region72
      $region71: #{tpu_custom_call.1} parent=43 // pred_region
        _
      $region72: #{tpu_custom_call.1} parent=43 // pred_fallthru
        _
      // Predicated region
      $region73: #{tpu_custom_call.1} parent=43 // pred_check
        %p666 = pneg %p219
      $region74: #{tpu_custom_call.1} parent=43 // pred_check_branch
        %668 = sbr.rel (%p666) target = $region76
      $region75: #{tpu_custom_call.1} parent=43 // pred_region
        _
      $region76: #{tpu_custom_call.1} parent=43 // pred_fallthru
        _
      // Predicated region
      $region77: #{tpu_custom_call.1} parent=43 // pred_check
        %p669 = pneg %p240
      $region78: #{tpu_custom_call.1} parent=43 // pred_check_branch
        %671 = sbr.rel (%p669) target = $region80
      $region79: #{tpu_custom_call.1} parent=43 // pred_region
        _
      $region80: #{tpu_custom_call.1} parent=43 // pred_fallthru
        _
      // Predicated region
      $region81: #{tpu_custom_call.1} parent=43 // pred_check
        %p672 = pneg %p177
      $region82: #{tpu_custom_call.1} parent=43 // pred_check_branch
        %674 = sbr.rel (%p672) target = $region84
      $region83: #{tpu_custom_call.1} parent=43 // pred_region
        _
      $region84: #{tpu_custom_call.1} parent=43 // pred_fallthru
        _
      // Predicated region
      $region85: #{tpu_custom_call.1} parent=43 // pred_check
        %p675 = pneg %p198
      $region86: #{tpu_custom_call.1} parent=43 // pred_check_branch
        %677 = sbr.rel (%p675) target = $region88
      $region87: #{tpu_custom_call.1} parent=43 // pred_region
        _
      $region88: #{tpu_custom_call.1} parent=43 // pred_fallthru
        _
      // Predicated region
      $region89: #{tpu_custom_call.1} parent=43 // pred_check
        %p678 = pneg %p219
      $region90: #{tpu_custom_call.1} parent=43 // pred_check_branch
        %680 = sbr.rel (%p678) target = $region92
      $region91: #{tpu_custom_call.1} parent=43 // pred_region
        _
      $region92: #{tpu_custom_call.1} parent=43 // pred_fallthru
        _
      // Predicated region
      $region93: #{tpu_custom_call.1} parent=43 // pred_check
        %p681 = pneg %p240
      $region94: #{tpu_custom_call.1} parent=43 // pred_check_branch
        %683 = sbr.rel (%p681) target = $region96
      $region95: #{tpu_custom_call.1} parent=43 // pred_region
        _
      $region96: #{tpu_custom_call.1} parent=43 // pred_fallthru
        _
    $region44: #{tpu_custom_call.1} parent=5 // pred_fallthru
      _
    %p684 = scmp.le.s32.totalorder 2, %s16
    // Predicated region
    $region97: #{tpu_custom_call.1} parent=5 // pred_check
      %p685 = pneg %p684
    $region98: #{tpu_custom_call.1} parent=5 // pred_check_branch
      %687 = sbr.rel (%p685) target = $region100
    $region99: #{tpu_custom_call.1} parent=5 // pred_region
      %s688 = ssub.s32 %s16, 2
    $region100: #{tpu_custom_call.1} parent=5 // pred_fallthru
      _
  $region6: #{tpu_custom_call.1} parent=0 // loop_footer
    %s20 = sadd.s32 1, %s16
  $region7: #{tpu_custom_call.1} parent=0 // loop_footer_branch
    %15 = sbr.rel target = $region3
  $region8: #{tpu_custom_call.1} parent=0 // loop_exit
    _

</llo_original>
